<compile_context>
chip_gen: v7x
topology: tpu7x:2x2x1
jax: 0.10.0
libtpu: 0.0.40
codegen_flags: <defaults>
</compile_context>

<pallas_src>
import functools

import jax
import jax.numpy as jnp
from jax import lax
from jax.experimental import pallas as pl
from jax.experimental.pallas import tpu as pltpu


# ----------------------------- Pallas kernel ---------------------------------


def _fused_conv_gn_se_kernel(x_ref, w_ref, b_ref, gamma_ref, beta_ref,
                             w1_ref, w2t_ref, o_ref, *, act_norm):
    # x_ref:   (1, Kp, HW) bf16  shifted-window taps of one batch element (Kp = padded KH*KW*Cin)
    # w_ref:   (C, Kp)     bf16  conv weight (zero-padded on the contraction axis)
    # b_ref:   (C, 1)      f32   conv bias
    # gamma/beta: (C, 1)   f32   GroupNorm affine
    # w1_ref:  (C, HID)    f32   SE fc1 weight (pooled[c] -> hidden)
    # w2t_ref: (C, HID)    f32   SE fc2 weight, transposed (hidden -> gate[c])
    # o_ref:   (1, C, HW)  f32
    y = jnp.dot(w_ref[...], x_ref[0], preferred_element_type=jnp.float32)   # (C, HW)
    y = y + b_ref[...]
    c, hw = y.shape

    if act_norm:
        # GroupNorm, num_groups=2, eps=1e-5, biased variance; two-pass for stability.
        half = c // 2
        inv_n = 1.0 / float(half * hw)
        rid = lax.broadcasted_iota(jnp.int32, (c, 1), 0)
        mask0 = (rid < half).astype(jnp.float32)                            # (C,1)
        mask1 = 1.0 - mask0

        row_sum = jnp.sum(y, axis=1, keepdims=True)                         # (C,1)
        m0 = jnp.sum(row_sum * mask0, axis=0, keepdims=True) * inv_n        # (1,1)
        m1 = jnp.sum(row_sum * mask1, axis=0, keepdims=True) * inv_n

        mean = mask0 * m0 + mask1 * m1                                      # (C,1)
        d = y - mean
        dsq_row = jnp.sum(d * d, axis=1, keepdims=True)                     # (C,1)
        v0 = jnp.sum(dsq_row * mask0, axis=0, keepdims=True) * inv_n        # (1,1)
        v1 = jnp.sum(dsq_row * mask1, axis=0, keepdims=True) * inv_n
        rstd = mask0 * lax.rsqrt(v0 + 1e-5) + mask1 * lax.rsqrt(v1 + 1e-5)  # (C,1)

        y = d * rstd * gamma_ref[...] + beta_ref[...]
        y = jnp.where(y > 0.0, y, 0.2 * y)                                  # LeakyReLU(0.2)

    # ---- SE attention: avg-pool -> fc1 -> ReLU -> fc2 -> sigmoid -> scale (VPU path) ----
    pooled = jnp.sum(y, axis=1, keepdims=True) * (1.0 / float(hw))          # (C,1)
    h = jnp.sum(pooled * w1_ref[...], axis=0, keepdims=True)                # (1,HID)
    h = jnp.maximum(h, 0.0)
    gate = jax.nn.sigmoid(jnp.sum(w2t_ref[...] * h, axis=1, keepdims=True)) # (C,1)
    o_ref[0] = (y * gate).astype(o_ref.dtype)


# ----------------------------- JAX glue / wrapper -----------------------------


def _conv_taps(x_nchw, kh, kw, stride, padding):
    """Shifted-window taps: (B, KH*KW*Cin, OH*OW); contraction index ordered (kh, kw, cin)."""
    xp = jnp.pad(x_nchw, ((0, 0), (0, 0), (padding, padding), (padding, padding)))
    b, cin, hp, wp = xp.shape
    oh = (hp - kh) // stride + 1
    ow = (wp - kw) // stride + 1
    windows = []
    for i in range(kh):
        for j in range(kw):
            windows.append(xp[:, :, i:i + stride * oh:stride, j:j + stride * ow:stride])
    taps = jnp.concatenate(windows, axis=1)                # (B, KH*KW*Cin, OH, OW)
    return taps.reshape(b, kh * kw * cin, oh * ow), oh, ow


def _round_up(n, m):
    return ((n + m - 1) // m) * m


def basic_conv2d_forward(x_nchw, params, *, stride, padding, act_norm):
    """Pallas implementation of BasicConv2d.forward (transpose=False path)."""
    w = params["conv_w"]            # (Cout, Cin, KH, KW)  PyTorch OIHW
    bias = params["conv_b"]         # (Cout,)
    gamma = params["gn_gamma"]      # (Cout,)
    beta = params["gn_beta"]        # (Cout,)
    w1 = params["se_w1"]            # (Cout, HID)
    w2 = params["se_w2"]            # (HID, Cout)

    cout, cin, kh, kw = w.shape
    assert cout % 2 == 0, "GroupNorm(2, C) requires even channel count"
    b = x_nchw.shape[0]
    hid = w1.shape[1]

    taps, oh, ow = _conv_taps(x_nchw.astype(jnp.float32), kh, kw, stride, padding)
    hw = oh * ow
    k_dim = kh * kw * cin
    # Pad the contraction axis to a multiple of 16 (bf16 sublane packing) so both matmul
    # operands load as full, unmasked tiles; zeros contribute nothing to the accumulation.
    k_pad = _round_up(k_dim, 16)
    if k_pad != k_dim:
        taps = jnp.pad(taps, ((0, 0), (0, k_pad - k_dim), (0, 0)))
    taps = taps.astype(jnp.bfloat16)                       # bf16 MXU input, f32 accumulate

    # OIHW -> (Cout, KH, KW, Cin) -> (Cout, K), matching the tap ordering (kh, kw, cin).
    w_mat = jnp.transpose(w, (0, 2, 3, 1)).reshape(cout, k_dim)
    if k_pad != k_dim:
        w_mat = jnp.pad(w_mat, ((0, 0), (0, k_pad - k_dim)))
    w_mat = w_mat.astype(jnp.bfloat16)
    bias_c = bias.reshape(cout, 1).astype(jnp.float32)
    gamma_c = gamma.reshape(cout, 1).astype(jnp.float32)
    beta_c = beta.reshape(cout, 1).astype(jnp.float32)
    w1_c = w1.astype(jnp.float32)                          # (Cout, HID)
    w2t_c = jnp.transpose(w2).astype(jnp.float32)          # (Cout, HID)

    cost = pl.CostEstimate(
        flops=2 * b * cout * k_pad * hw + 12 * b * cout * hw,
        transcendentals=b * (cout + 4),
        bytes_accessed=(b * k_pad * hw * 2 + cout * k_pad * 2
                        + (3 * cout + 2 * cout * hid) * 4
                        + b * cout * hw * 4),
    )

    out3 = pl.pallas_call(
        functools.partial(_fused_conv_gn_se_kernel, act_norm=act_norm),
        out_shape=jax.ShapeDtypeStruct((b, cout, hw), jnp.float32),
        grid=(b,),
        in_specs=[
            pl.BlockSpec((1, k_pad, hw), lambda i: (i, 0, 0)),
            pl.BlockSpec((cout, k_pad), lambda i: (0, 0)),   # resident across the batch grid
            pl.BlockSpec((cout, 1), lambda i: (0, 0)),
            pl.BlockSpec((cout, 1), lambda i: (0, 0)),
            pl.BlockSpec((cout, 1), lambda i: (0, 0)),
            pl.BlockSpec((cout, hid), lambda i: (0, 0)),
            pl.BlockSpec((cout, hid), lambda i: (0, 0)),
        ],
        out_specs=pl.BlockSpec((1, cout, hw), lambda i: (i, 0, 0)),
        compiler_params=pltpu.CompilerParams(dimension_semantics=("parallel",)),
        cost_estimate=cost,
    )(taps, w_mat, bias_c, gamma_c, beta_c, w1_c, w2t_c)

    # (B, C, HW) is already channels-first: just reshape, no transpose.
    return out3.reshape(b, cout, oh, ow)


# ----------------------------- pure-JAX reference ------------------------------


def _reference_forward(x_nchw, params, *, stride, padding, act_norm):
    w = params["conv_w"]
    bias = params["conv_b"]
    y = lax.conv_general_dilated(
        x_nchw, w, window_strides=(stride, stride),
        padding=((padding, padding), (padding, padding)),
        dimension_numbers=("NCHW", "OIHW", "NCHW"),
    ) + bias[None, :, None, None]
    if act_norm:
        b, c, h, wd = y.shape
        yg = y.reshape(b, 2, (c // 2) * h * wd)
        mean = yg.mean(-1, keepdims=True)
        var = yg.var(-1, keepdims=True)
        yn = ((yg - mean) / jnp.sqrt(var + 1e-5)).reshape(b, c, h, wd)
        y = yn * params["gn_gamma"][None, :, None, None] + params["gn_beta"][None, :, None, None]
        y = jnp.where(y > 0, y, 0.2 * y)
    pooled = y.mean(axis=(2, 3))                      # (B, C)
    hdn = jnp.maximum(pooled @ params["se_w1"], 0.0)
    s = jax.nn.sigmoid(hdn @ params["se_w2"])         # (B, C)
    return y * s[:, :, None, None]


# ----------------------------------- main --------------------------------------


if __name__ == "__main__":
    # Module config: BasicConv2d(in_channels=4, out_channels=32, kernel_size=3,
    #                            stride=1, padding=1, transpose=False, act_norm=True)
    B, CIN, H, W = 2, 4, 16, 16
    COUT, K, STRIDE, PAD = 32, 3, 1, 1
    ACT_NORM = True
    SE_REDUCTION = 16
    HID = COUT // SE_REDUCTION

    key = jax.random.PRNGKey(0)
    k_x, k_w, k_b, k_w1, k_w2 = jax.random.split(key, 5)

    x = jax.random.normal(k_x, (B, CIN, H, W), dtype=jnp.float32)
    params = {
        "conv_w": 0.1 * jax.random.normal(k_w, (COUT, CIN, K, K), dtype=jnp.float32),
        "conv_b": 0.1 * jax.random.normal(k_b, (COUT,), dtype=jnp.float32),
        "gn_gamma": jnp.ones((COUT,), dtype=jnp.float32),   # PyTorch GroupNorm default
        "gn_beta": jnp.zeros((COUT,), dtype=jnp.float32),
        "se_w1": 0.2 * jax.random.normal(k_w1, (COUT, HID), dtype=jnp.float32),
        "se_w2": 0.2 * jax.random.normal(k_w2, (HID, COUT), dtype=jnp.float32),
    }

    out = basic_conv2d_forward(x, params, stride=STRIDE, padding=PAD, act_norm=ACT_NORM)
    out = jax.block_until_ready(out)

    ref = _reference_forward(x, params, stride=STRIDE, padding=PAD, act_norm=ACT_NORM)
    assert out.shape == (B, COUT, H, W), out.shape
    # bf16 MXU inputs (f32 accumulate) vs. the pure-f32 reference -> loosened tolerance.
    max_err = float(jnp.max(jnp.abs(out - ref)))
    assert jnp.allclose(out, ref, atol=5e-2, rtol=5e-2), max_err

    print("KERNEL_OK")
</pallas_src>

<mosaic_0001>
module attributes {stable_mosaic.version = 11 : i64} {
  func.func @_fused_conv_gn_se_kernel(%arg0: i32, %arg1: memref<1x48x256xbf16, #tpu.memory_space<vmem>>, %arg2: memref<32x48xbf16, #tpu.memory_space<vmem>>, %arg3: memref<32x1xf32, #tpu.memory_space<vmem>>, %arg4: memref<32x1xf32, #tpu.memory_space<vmem>>, %arg5: memref<32x1xf32, #tpu.memory_space<vmem>>, %arg6: memref<32x2xf32, #tpu.memory_space<vmem>>, %arg7: memref<32x2xf32, #tpu.memory_space<vmem>>, %arg8: memref<1x32x256xf32, #tpu.memory_space<vmem>>) attributes {dimension_semantics = [#tpu.dimension_semantics<parallel>], iteration_bounds = array<i64: 2>, scalar_prefetch = 0 : i64, scratch_operands = 0 : i64, tpu.core_type = #tpu.core_type<tc>, window_params = [{transform_indices = @transform_0, window_bounds = array<i64: 1, 48, 256>}, {pipeline_mode = #tpu.pipeline_mode<synchronous>, transform_indices = @transform_1, window_bounds = array<i64: 32, 48>}, {pipeline_mode = #tpu.pipeline_mode<synchronous>, transform_indices = @transform_2, window_bounds = array<i64: 32, 1>}, {pipeline_mode = #tpu.pipeline_mode<synchronous>, transform_indices = @transform_3, window_bounds = array<i64: 32, 1>}, {pipeline_mode = #tpu.pipeline_mode<synchronous>, transform_indices = @transform_4, window_bounds = array<i64: 32, 1>}, {pipeline_mode = #tpu.pipeline_mode<synchronous>, transform_indices = @transform_5, window_bounds = array<i64: 32, 2>}, {pipeline_mode = #tpu.pipeline_mode<synchronous>, transform_indices = @transform_6, window_bounds = array<i64: 32, 2>}, {transform_indices = @transform_7, window_bounds = array<i64: 1, 32, 256>}]} {
    %c0 = arith.constant 0 : index
    %c0_0 = arith.constant 0 : index
    %0 = vector.load %arg2[%c0, %c0_0] : memref<32x48xbf16, #tpu.memory_space<vmem>>, vector<32x48xbf16>
    %c0_1 = arith.constant 0 : index
    %c0_2 = arith.constant 0 : index
    %c0_3 = arith.constant 0 : index
    %1 = vector.load %arg1[%c0_1, %c0_2, %c0_3] : memref<1x48x256xbf16, #tpu.memory_space<vmem>>, vector<1x48x256xbf16>
    %2 = vector.shape_cast %1 : vector<1x48x256xbf16> to vector<48x256xbf16>
    %cst = arith.constant dense<0.000000e+00> : vector<32x256xf32>
    %3 = tpu.matmul %0, %2, %cst {dimension_numbers = #tpu.dot_dimension_numbers<[1], [0], [0], [1], [0, 0, 1, 1], [], []>} : vector<32x48xbf16>, vector<48x256xbf16>, vector<32x256xf32> -> vector<32x256xf32>
    %c0_4 = arith.constant 0 : index
    %c0_5 = arith.constant 0 : index
    %4 = vector.load %arg3[%c0_4, %c0_5] : memref<32x1xf32, #tpu.memory_space<vmem>>, vector<32x1xf32>
    %5 = vector.broadcast %4 : vector<32x1xf32> to vector<32x256xf32>
    %6 = arith.addf %3, %5 : vector<32x256xf32>
    %7 = tpu.iota {dimensions = array<i32: 0>} : vector<32x1xi32>
    %c16_i32 = arith.constant 16 : i32
    %8 = vector.broadcast %c16_i32 : i32 to vector<32x1xi32>
    %9 = arith.cmpi slt, %7, %8 : vector<32x1xi32>
    %10 = arith.extui %9 : vector<32x1xi1> to vector<32x1xi32>
    %11 = arith.sitofp %10 : vector<32x1xi32> to vector<32x1xf32>
    %cst_6 = arith.constant 1.000000e+00 : f32
    %12 = vector.broadcast %cst_6 : f32 to vector<32x1xf32>
    %13 = arith.subf %12, %11 : vector<32x1xf32>
    %cst_7 = arith.constant dense<0.000000e+00> : vector<32xf32>
    %14 = vector.multi_reduction <add>, %6, %cst_7 [1] : vector<32x256xf32> to vector<32xf32>
    %15 = vector.shape_cast %14 : vector<32xf32> to vector<32x1xf32>
    %16 = arith.mulf %15, %11 : vector<32x1xf32>
    %cst_8 = arith.constant dense<0.000000e+00> : vector<1xf32>
    %17 = vector.multi_reduction <add>, %16, %cst_8 [0] : vector<32x1xf32> to vector<1xf32>
    %18 = vector.shape_cast %17 : vector<1xf32> to vector<1x1xf32>
    %cst_9 = arith.constant 2.44140625E-4 : f32
    %19 = vector.broadcast %cst_9 : f32 to vector<1x1xf32>
    %20 = arith.mulf %18, %19 : vector<1x1xf32>
    %21 = arith.mulf %15, %13 : vector<32x1xf32>
    %cst_10 = arith.constant dense<0.000000e+00> : vector<1xf32>
    %22 = vector.multi_reduction <add>, %21, %cst_10 [0] : vector<32x1xf32> to vector<1xf32>
    %23 = vector.shape_cast %22 : vector<1xf32> to vector<1x1xf32>
    %cst_11 = arith.constant 2.44140625E-4 : f32
    %24 = vector.broadcast %cst_11 : f32 to vector<1x1xf32>
    %25 = arith.mulf %23, %24 : vector<1x1xf32>
    %26 = vector.broadcast %20 : vector<1x1xf32> to vector<32x1xf32>
    %27 = arith.mulf %11, %26 : vector<32x1xf32>
    %28 = vector.broadcast %25 : vector<1x1xf32> to vector<32x1xf32>
    %29 = arith.mulf %13, %28 : vector<32x1xf32>
    %30 = arith.addf %27, %29 : vector<32x1xf32>
    %31 = vector.broadcast %30 : vector<32x1xf32> to vector<32x256xf32>
    %32 = arith.subf %6, %31 : vector<32x256xf32>
    %33 = arith.mulf %32, %32 : vector<32x256xf32>
    %cst_12 = arith.constant dense<0.000000e+00> : vector<32xf32>
    %34 = vector.multi_reduction <add>, %33, %cst_12 [1] : vector<32x256xf32> to vector<32xf32>
    %35 = vector.shape_cast %34 : vector<32xf32> to vector<32x1xf32>
    %36 = arith.mulf %35, %11 : vector<32x1xf32>
    %cst_13 = arith.constant dense<0.000000e+00> : vector<1xf32>
    %37 = vector.multi_reduction <add>, %36, %cst_13 [0] : vector<32x1xf32> to vector<1xf32>
    %38 = vector.shape_cast %37 : vector<1xf32> to vector<1x1xf32>
    %cst_14 = arith.constant 2.44140625E-4 : f32
    %39 = vector.broadcast %cst_14 : f32 to vector<1x1xf32>
    %40 = arith.mulf %38, %39 : vector<1x1xf32>
    %41 = arith.mulf %35, %13 : vector<32x1xf32>
    %cst_15 = arith.constant dense<0.000000e+00> : vector<1xf32>
    %42 = vector.multi_reduction <add>, %41, %cst_15 [0] : vector<32x1xf32> to vector<1xf32>
    %43 = vector.shape_cast %42 : vector<1xf32> to vector<1x1xf32>
    %cst_16 = arith.constant 2.44140625E-4 : f32
    %44 = vector.broadcast %cst_16 : f32 to vector<1x1xf32>
    %45 = arith.mulf %43, %44 : vector<1x1xf32>
    %cst_17 = arith.constant 9.99999974E-6 : f32
    %46 = vector.broadcast %cst_17 : f32 to vector<1x1xf32>
    %47 = arith.addf %40, %46 : vector<1x1xf32>
    %48 = math.rsqrt %47 : vector<1x1xf32>
    %49 = vector.broadcast %48 : vector<1x1xf32> to vector<32x1xf32>
    %50 = arith.mulf %11, %49 : vector<32x1xf32>
    %cst_18 = arith.constant 9.99999974E-6 : f32
    %51 = vector.broadcast %cst_18 : f32 to vector<1x1xf32>
    %52 = arith.addf %45, %51 : vector<1x1xf32>
    %53 = math.rsqrt %52 : vector<1x1xf32>
    %54 = vector.broadcast %53 : vector<1x1xf32> to vector<32x1xf32>
    %55 = arith.mulf %13, %54 : vector<32x1xf32>
    %56 = arith.addf %50, %55 : vector<32x1xf32>
    %57 = vector.broadcast %56 : vector<32x1xf32> to vector<32x256xf32>
    %58 = arith.mulf %32, %57 : vector<32x256xf32>
    %c0_19 = arith.constant 0 : index
    %c0_20 = arith.constant 0 : index
    %59 = vector.load %arg4[%c0_19, %c0_20] : memref<32x1xf32, #tpu.memory_space<vmem>>, vector<32x1xf32>
    %60 = vector.broadcast %59 : vector<32x1xf32> to vector<32x256xf32>
    %61 = arith.mulf %58, %60 : vector<32x256xf32>
    %c0_21 = arith.constant 0 : index
    %c0_22 = arith.constant 0 : index
    %62 = vector.load %arg5[%c0_21, %c0_22] : memref<32x1xf32, #tpu.memory_space<vmem>>, vector<32x1xf32>
    %63 = vector.broadcast %62 : vector<32x1xf32> to vector<32x256xf32>
    %64 = arith.addf %61, %63 : vector<32x256xf32>
    %cst_23 = arith.constant 0.000000e+00 : f32
    %65 = vector.broadcast %cst_23 : f32 to vector<32x256xf32>
    %66 = arith.cmpf ogt, %64, %65 : vector<32x256xf32>
    %cst_24 = arith.constant 2.000000e-01 : f32
    %67 = vector.broadcast %cst_24 : f32 to vector<32x256xf32>
    %68 = arith.mulf %67, %64 : vector<32x256xf32>
    %69 = arith.select %66, %64, %68 : vector<32x256xi1>, vector<32x256xf32>
    %cst_25 = arith.constant dense<0.000000e+00> : vector<32xf32>
    %70 = vector.multi_reduction <add>, %69, %cst_25 [1] : vector<32x256xf32> to vector<32xf32>
    %71 = vector.shape_cast %70 : vector<32xf32> to vector<32x1xf32>
    %cst_26 = arith.constant 3.906250e-03 : f32
    %72 = vector.broadcast %cst_26 : f32 to vector<32x1xf32>
    %73 = arith.mulf %71, %72 : vector<32x1xf32>
    %c0_27 = arith.constant 0 : index
    %c0_28 = arith.constant 0 : index
    %74 = vector.load %arg6[%c0_27, %c0_28] : memref<32x2xf32, #tpu.memory_space<vmem>>, vector<32x2xf32>
    %75 = vector.broadcast %73 : vector<32x1xf32> to vector<32x2xf32>
    %76 = arith.mulf %75, %74 : vector<32x2xf32>
    %cst_29 = arith.constant dense<0.000000e+00> : vector<2xf32>
    %77 = vector.multi_reduction <add>, %76, %cst_29 [0] : vector<32x2xf32> to vector<2xf32>
    %78 = vector.shape_cast %77 : vector<2xf32> to vector<1x2xf32>
    %cst_30 = arith.constant 0.000000e+00 : f32
    %79 = vector.broadcast %cst_30 : f32 to vector<1x2xf32>
    %80 = arith.maximumf %78, %79 : vector<1x2xf32>
    %c0_31 = arith.constant 0 : index
    %c0_32 = arith.constant 0 : index
    %81 = vector.load %arg7[%c0_31, %c0_32] : memref<32x2xf32, #tpu.memory_space<vmem>>, vector<32x2xf32>
    %82 = vector.broadcast %80 : vector<1x2xf32> to vector<32x2xf32>
    %83 = arith.mulf %81, %82 : vector<32x2xf32>
    %cst_33 = arith.constant dense<0.000000e+00> : vector<32xf32>
    %84 = vector.multi_reduction <add>, %83, %cst_33 [1] : vector<32x2xf32> to vector<32xf32>
    %85 = vector.shape_cast %84 : vector<32xf32> to vector<32x1xf32>
    %86 = arith.negf %85 : vector<32x1xf32>
    %87 = math.exp %86 : vector<32x1xf32>
    %cst_34 = arith.constant 1.000000e+00 : f32
    %88 = vector.broadcast %cst_34 : f32 to vector<32x1xf32>
    %89 = arith.addf %88, %87 : vector<32x1xf32>
    %90 = arith.divf %88, %89 : vector<32x1xf32>
    %91 = vector.broadcast %90 : vector<32x1xf32> to vector<32x256xf32>
    %92 = arith.mulf %69, %91 : vector<32x256xf32>
    %c0_35 = arith.constant 0 : index
    %c0_36 = arith.constant 0 : index
    %c0_37 = arith.constant 0 : index
    %93 = vector.load %arg8[%c0_35, %c0_36, %c0_37] : memref<1x32x256xf32, #tpu.memory_space<vmem>>, vector<1x32x256xf32>
    %94 = vector.shape_cast %93 : vector<1x32x256xf32> to vector<32x256xf32>
    %95 = vector.shape_cast %92 : vector<32x256xf32> to vector<1x32x256xf32>
    tpu.vector_store %arg8[%c0_35, %c0_36, %c0_37], %95 {strides = array<i32>} : memref<1x32x256xf32, #tpu.memory_space<vmem>>, vector<1x32x256xf32>,
    return
  }
  func.func @transform_0(%arg0: i32) -> (i32, i32, i32) {
    %c0_i32 = arith.constant 0 : i32
    %c0_i32_0 = arith.constant 0 : i32
    %c0_i32_1 = arith.constant 0 : i32
    return %arg0, %c0_i32, %c0_i32_0 : i32, i32, i32
  }
  func.func @transform_1(%arg0: i32) -> (i32, i32) {
    %c0_i32 = arith.constant 0 : i32
    %c0_i32_0 = arith.constant 0 : i32
    %c0_i32_1 = arith.constant 0 : i32
    return %c0_i32, %c0_i32_0 : i32, i32
  }
  func.func @transform_2(%arg0: i32) -> (i32, i32) {
    %c0_i32 = arith.constant 0 : i32
    %c0_i32_0 = arith.constant 0 : i32
    %c0_i32_1 = arith.constant 0 : i32
    return %c0_i32, %c0_i32_0 : i32, i32
  }
  func.func @transform_3(%arg0: i32) -> (i32, i32) {
    %c0_i32 = arith.constant 0 : i32
    %c0_i32_0 = arith.constant 0 : i32
    %c0_i32_1 = arith.constant 0 : i32
    return %c0_i32, %c0_i32_0 : i32, i32
  }
  func.func @transform_4(%arg0: i32) -> (i32, i32) {
    %c0_i32 = arith.constant 0 : i32
    %c0_i32_0 = arith.constant 0 : i32
    %c0_i32_1 = arith.constant 0 : i32
    return %c0_i32, %c0_i32_0 : i32, i32
  }
  func.func @transform_5(%arg0: i32) -> (i32, i32) {
    %c0_i32 = arith.constant 0 : i32
    %c0_i32_0 = arith.constant 0 : i32
    %c0_i32_1 = arith.constant 0 : i32
    return %c0_i32, %c0_i32_0 : i32, i32
  }
  func.func @transform_6(%arg0: i32) -> (i32, i32) {
    %c0_i32 = arith.constant 0 : i32
    %c0_i32_0 = arith.constant 0 : i32
    %c0_i32_1 = arith.constant 0 : i32
    return %c0_i32, %c0_i32_0 : i32, i32
  }
  func.func @transform_7(%arg0: i32) -> (i32, i32, i32) {
    %c0_i32 = arith.constant 0 : i32
    %c0_i32_0 = arith.constant 0 : i32
    %c0_i32_1 = arith.constant 0 : i32
    return %arg0, %c0_i32, %c0_i32_0 : i32, i32, i32
  }
}

</mosaic_0001>

<llo_original>
// kernel: tpu_custom_call.1
$region0: #{tpu_custom_call.1}
  #allocation0 [shape = 'u32[]', space=smem, size = 0x4, offset = 0x4, fixed_abs, tag = 'smem constant byte address 0x4 - core index']
  #allocation1 [shape = 'u32[144,128]{1,0:T(1,128)}', space=vmem, size = 0x12000, scoped, tag = 'internal scratch']
  %s0 = inlined_call_operand.vmem [shape: bf16[2,48,256], index: 0, kind: input, shape index: {}]
  %s1 = inlined_call_operand.vmem [shape: bf16[32,48], index: 1, kind: input, shape index: {}]
  %s2 = inlined_call_operand.vmem [shape: f32[32,1], index: 2, kind: input, shape index: {}]
  %s3 = inlined_call_operand.vmem [shape: f32[32,1], index: 3, kind: input, shape index: {}]
  %s4 = inlined_call_operand.vmem [shape: f32[32,1], index: 4, kind: input, shape index: {}]
  %s5 = inlined_call_operand.vmem [shape: f32[32,2], index: 5, kind: input, shape index: {}]
  %s6 = inlined_call_operand.vmem [shape: f32[32,2], index: 6, kind: input, shape index: {}]
  %s7 = inlined_call_operand.hbm [shape: f32[2,32,256], index: 7, kind: output, shape index: {}]
  %s8 = sld [smem:[#allocation0]]
  $region61: #{tpu_custom_call.1} parent=0
    _
  %s10 = ssub.s32 1, %s8
  %s11 = scalar_select 0, %s10, %s8
  $region1: #{tpu_custom_call.1} parent=0
    #allocation2 [shape = 'u8[65536]{0}', space=vmem, size = 0x10000, scoped, tag = 'output window, operand 0']
    #allocation3 [shape = 's32[2]{0}', space=sflag, size = 0x8, scoped, tag = 'scoped memory for tpu_custom_call.1']
    %12 = vsyncpa [#allocation3], 0
    %s13 = scalar_lea.sflag [#allocation3], 1
    %14 = vsyncpa %s13, 0
    loop: start=0, step=1, limit=4
    $region2: #{tpu_custom_call.1} parent=1 // loop_pre_header
      _
    $region3: #{tpu_custom_call.1} parent=1 // loop_header
      %s16 = sphi 0, %s20
      %p17 = scmp.ge.s32.totalorder %s16, 4
      %s26 = sphi 0, %s28
      %s29 = sphi 0, %s26
      %s30 = sphi 0, %s29
      %s46 = sphi 0, %s30
      %s50 = sphi 0, %s50
      %s52 = sphi 0, %s50
      %s53 = sphi 0, %s52
      %s67 = sphi 0, %s53
      %s71 = sphi 0, %s71
      %s73 = sphi 0, %s71
      %s74 = sphi 0, %s73
      %s88 = sphi 0, %s74
      %s92 = sphi 0, %s92
      %s94 = sphi 0, %s92
      %s95 = sphi 0, %s94
      %s109 = sphi 0, %s95
      %s113 = sphi 0, %s113
      %s115 = sphi 0, %s113
      %s116 = sphi 0, %s115
      %s130 = sphi 0, %s116
      %s134 = sphi 0, %s134
      %s136 = sphi 0, %s134
      %s137 = sphi 0, %s136
      %s151 = sphi 0, %s137
      %s155 = sphi 0, %s155
      %s157 = sphi 0, %s155
      %s158 = sphi 0, %s157
      %s172 = sphi 0, %s158
      %s178 = sphi 0, %s180
      %s181 = sphi 0, %s178
      %s182 = sphi 0, %s181
      %s198 = sphi 0, %s182
    $region4: #{tpu_custom_call.1} parent=1 // loop_header_branch
      %19 = sbr.rel (%p17) target = $region8
    $region5: #{tpu_custom_call.1} parent=1 // loop_body
      %s21 = ssub.s32 %s16, 1
      %s22 = ssub.s32 %s16, 2
      %s23 = sadd.s32 %s16, 1
      %s24 = ssub.s32 %s16, %s23
      %p25 = scmp.eq.s32.totalorder %s24, 0
      %s27 = sadd.s32 %s26, 1
      %s28 = scalar_select %p25, %s26, %s27
      %p31 = pneg %p25
      %p32 = scmp.eq.s32.totalorder %s16, 1
      %p33 = por %p31, %p32
      %p34 = scmp.ne.s32.totalorder %s26, %s29
      %p35 = scmp.eq.s32.totalorder %s16, 0
      %p36 = por %p34, %p35
      %p37 = scmp.ne.s32.totalorder %s26, %s29
      %p38 = scmp.eq.s32.totalorder %s21, 1
      %p39 = por %p37, %p38
      %p40 = scmp.ne.s32.totalorder %s29, %s30
      %p41 = scmp.eq.s32.totalorder %s21, 0
      %p42 = por %p40, %p41
      %p43 = scmp.ne.s32.totalorder %s29, %s30
      %p44 = scmp.eq.s32.totalorder %s22, 1
      %p45 = por %p43, %p44
      %p47 = scmp.ne.s32.totalorder %s30, %s46
      %p48 = scmp.eq.s32.totalorder %s22, 0
      %p49 = por %p47, %p48
      %s51 = sadd.s32 %s50, 1
      %p54 = scmp.eq.s32.totalorder %s16, 1
      %p55 = scmp.ne.s32.totalorder %s50, %s52
      %p56 = scmp.eq.s32.totalorder %s16, 0
      %p57 = por %p55, %p56
      %p58 = scmp.ne.s32.totalorder %s50, %s52
      %p59 = scmp.eq.s32.totalorder %s21, 1
      %p60 = por %p58, %p59
      %p61 = scmp.ne.s32.totalorder %s52, %s53
      %p62 = scmp.eq.s32.totalorder %s21, 0
      %p63 = por %p61, %p62
      %p64 = scmp.ne.s32.totalorder %s52, %s53
      %p65 = scmp.eq.s32.totalorder %s22, 1
      %p66 = por %p64, %p65
      %p68 = scmp.ne.s32.totalorder %s53, %s67
      %p69 = scmp.eq.s32.totalorder %s22, 0
      %p70 = por %p68, %p69
      %s72 = sadd.s32 %s71, 1
      %p75 = scmp.eq.s32.totalorder %s16, 1
      %p76 = scmp.ne.s32.totalorder %s71, %s73
      %p77 = scmp.eq.s32.totalorder %s16, 0
      %p78 = por %p76, %p77
      %p79 = scmp.ne.s32.totalorder %s71, %s73
      %p80 = scmp.eq.s32.totalorder %s21, 1
      %p81 = por %p79, %p80
      %p82 = scmp.ne.s32.totalorder %s73, %s74
      %p83 = scmp.eq.s32.totalorder %s21, 0
      %p84 = por %p82, %p83
      %p85 = scmp.ne.s32.totalorder %s73, %s74
      %p86 = scmp.eq.s32.totalorder %s22, 1
      %p87 = por %p85, %p86
      %p89 = scmp.ne.s32.totalorder %s74, %s88
      %p90 = scmp.eq.s32.totalorder %s22, 0
      %p91 = por %p89, %p90
      %s93 = sadd.s32 %s92, 1
      %p96 = scmp.eq.s32.totalorder %s16, 1
      %p97 = scmp.ne.s32.totalorder %s92, %s94
      %p98 = scmp.eq.s32.totalorder %s16, 0
      %p99 = por %p97, %p98
      %p100 = scmp.ne.s32.totalorder %s92, %s94
      %p101 = scmp.eq.s32.totalorder %s21, 1
      %p102 = por %p100, %p101
      %p103 = scmp.ne.s32.totalorder %s94, %s95
      %p104 = scmp.eq.s32.totalorder %s21, 0
      %p105 = por %p103, %p104
      %p106 = scmp.ne.s32.totalorder %s94, %s95
      %p107 = scmp.eq.s32.totalorder %s22, 1
      %p108 = por %p106, %p107
      %p110 = scmp.ne.s32.totalorder %s95, %s109
      %p111 = scmp.eq.s32.totalorder %s22, 0
      %p112 = por %p110, %p111
      %s114 = sadd.s32 %s113, 1
      %p117 = scmp.eq.s32.totalorder %s16, 1
      %p118 = scmp.ne.s32.totalorder %s113, %s115
      %p119 = scmp.eq.s32.totalorder %s16, 0
      %p120 = por %p118, %p119
      %p121 = scmp.ne.s32.totalorder %s113, %s115
      %p122 = scmp.eq.s32.totalorder %s21, 1
      %p123 = por %p121, %p122
      %p124 = scmp.ne.s32.totalorder %s115, %s116
      %p125 = scmp.eq.s32.totalorder %s21, 0
      %p126 = por %p124, %p125
      %p127 = scmp.ne.s32.totalorder %s115, %s116
      %p128 = scmp.eq.s32.totalorder %s22, 1
      %p129 = por %p127, %p128
      %p131 = scmp.ne.s32.totalorder %s116, %s130
      %p132 = scmp.eq.s32.totalorder %s22, 0
      %p133 = por %p131, %p132
      %s135 = sadd.s32 %s134, 1
      %p138 = scmp.eq.s32.totalorder %s16, 1
      %p139 = scmp.ne.s32.totalorder %s134, %s136
      %p140 = scmp.eq.s32.totalorder %s16, 0
      %p141 = por %p139, %p140
      %p142 = scmp.ne.s32.totalorder %s134, %s136
      %p143 = scmp.eq.s32.totalorder %s21, 1
      %p144 = por %p142, %p143
      %p145 = scmp.ne.s32.totalorder %s136, %s137
      %p146 = scmp.eq.s32.totalorder %s21, 0
      %p147 = por %p145, %p146
      %p148 = scmp.ne.s32.totalorder %s136, %s137
      %p149 = scmp.eq.s32.totalorder %s22, 1
      %p150 = por %p148, %p149
      %p152 = scmp.ne.s32.totalorder %s137, %s151
      %p153 = scmp.eq.s32.totalorder %s22, 0
      %p154 = por %p152, %p153
      %s156 = sadd.s32 %s155, 1
      %p159 = scmp.eq.s32.totalorder %s16, 1
      %p160 = scmp.ne.s32.totalorder %s155, %s157
      %p161 = scmp.eq.s32.totalorder %s16, 0
      %p162 = por %p160, %p161
      %p163 = scmp.ne.s32.totalorder %s155, %s157
      %p164 = scmp.eq.s32.totalorder %s21, 1
      %p165 = por %p163, %p164
      %p166 = scmp.ne.s32.totalorder %s157, %s158
      %p167 = scmp.eq.s32.totalorder %s21, 0
      %p168 = por %p166, %p167
      %p169 = scmp.ne.s32.totalorder %s157, %s158
      %p170 = scmp.eq.s32.totalorder %s22, 1
      %p171 = por %p169, %p170
      %p173 = scmp.ne.s32.totalorder %s158, %s172
      %p174 = scmp.eq.s32.totalorder %s22, 0
      %p175 = por %p173, %p174
      %s176 = ssub.s32 %s16, %s23
      %p177 = scmp.eq.s32.totalorder %s176, 0
      %s179 = sadd.s32 %s178, 1
      %s180 = scalar_select %p177, %s178, %s179
      %p183 = pneg %p177
      %p184 = scmp.eq.s32.totalorder %s16, 1
      %p185 = por %p183, %p184
      %p186 = scmp.ne.s32.totalorder %s178, %s181
      %p187 = scmp.eq.s32.totalorder %s16, 0
      %p188 = por %p186, %p187
      %p189 = scmp.ne.s32.totalorder %s178, %s181
      %p190 = scmp.eq.s32.totalorder %s21, 1
      %p191 = por %p189, %p190
      %p192 = scmp.ne.s32.totalorder %s181, %s182
      %p193 = scmp.eq.s32.totalorder %s21, 0
      %p194 = por %p192, %p193
      %p195 = scmp.ne.s32.totalorder %s181, %s182
      %p196 = scmp.eq.s32.totalorder %s22, 1
      %p197 = por %p195, %p196
      %p199 = scmp.ne.s32.totalorder %s182, %s198
      %p200 = scmp.eq.s32.totalorder %s22, 0
      %p201 = por %p199, %p200
      %p202 = scmp.le.s32.totalorder 1, %s16
      %p203 = scmp.lt.s32.totalorder %s16, 3
      %p204 = pnand %p202, %p203
      %p205 = pneg %p204
      // Predicated region
      $region9: #{tpu_custom_call.1} parent=5 // pred_check
        _
      $region10: #{tpu_custom_call.1} parent=5 // pred_check_branch
        %207 = sbr.rel (%p204) target = $region12
      $region11: #{tpu_custom_call.1} parent=5 // pred_region
        %s208 = ssub.s32 %s16, 1
        // Predicated region
        $region13: #{tpu_custom_call.1} parent=11 // pred_check
          %p209 = pneg %p63
        $region14: #{tpu_custom_call.1} parent=11 // pred_check_branch
          %211 = sbr.rel (%p209) target = $region16
        $region15: #{tpu_custom_call.1} parent=11 // pred_region
          _
        $region16: #{tpu_custom_call.1} parent=11 // pred_fallthru
          _
        // Predicated region
        $region17: #{tpu_custom_call.1} parent=11 // pred_check
          %p212 = pneg %p84
        $region18: #{tpu_custom_call.1} parent=11 // pred_check_branch
          %214 = sbr.rel (%p212) target = $region20
        $region19: #{tpu_custom_call.1} parent=11 // pred_region
          _
        $region20: #{tpu_custom_call.1} parent=11 // pred_fallthru
          _
        // Predicated region
        $region21: #{tpu_custom_call.1} parent=11 // pred_check
          %p215 = pneg %p105
        $region22: #{tpu_custom_call.1} parent=11 // pred_check_branch
          %217 = sbr.rel (%p215) target = $region24
        $region23: #{tpu_custom_call.1} parent=11 // pred_region
          _
        $region24: #{tpu_custom_call.1} parent=11 // pred_fallthru
          _
        // Predicated region
        $region25: #{tpu_custom_call.1} parent=11 // pred_check
          %p218 = pneg %p126
        $region26: #{tpu_custom_call.1} parent=11 // pred_check_branch
          %220 = sbr.rel (%p218) target = $region28
        $region27: #{tpu_custom_call.1} parent=11 // pred_region
          _
        $region28: #{tpu_custom_call.1} parent=11 // pred_fallthru
          _
        // Predicated region
        $region29: #{tpu_custom_call.1} parent=11 // pred_check
          %p221 = pneg %p147
        $region30: #{tpu_custom_call.1} parent=11 // pred_check_branch
          %223 = sbr.rel (%p221) target = $region32
        $region31: #{tpu_custom_call.1} parent=11 // pred_region
          _
        $region32: #{tpu_custom_call.1} parent=11 // pred_fallthru
          _
        // Predicated region
        $region33: #{tpu_custom_call.1} parent=11 // pred_check
          %p224 = pneg %p168
        $region34: #{tpu_custom_call.1} parent=11 // pred_check_branch
          %226 = sbr.rel (%p224) target = $region36
        $region35: #{tpu_custom_call.1} parent=11 // pred_region
          _
        $region36: #{tpu_custom_call.1} parent=11 // pred_fallthru
          _
      $region12: #{tpu_custom_call.1} parent=5 // pred_fallthru
        _
      %p227 = scmp.lt.s32.totalorder %s16, 2
      // Predicated region
      $region37: #{tpu_custom_call.1} parent=5 // pred_check
        %p228 = pneg %p227
      $region38: #{tpu_custom_call.1} parent=5 // pred_check_branch
        %230 = sbr.rel (%p228) target = $region40
      $region39: #{tpu_custom_call.1} parent=5 // pred_region
        // Predicated region
        $region41: #{tpu_custom_call.1} parent=39 // pred_check
          %p231 = pneg %p36
        $region42: #{tpu_custom_call.1} parent=39 // pred_check_branch
          %233 = sbr.rel (%p231) target = $region44
        $region43: #{tpu_custom_call.1} parent=39 // pred_region
          %p234 = scmp.lt.s32.totalorder %s16, 1
          %s235 = scalar_select %p234, %s16, 1
          %s236 = smul.addr %s235, 12
          %s237 = smul.addr %s236, 4
          %s238 = scalar_lea.vmem %s0, %s237
        $region44: #{tpu_custom_call.1} parent=39 // pred_fallthru
          _
      $region40: #{tpu_custom_call.1} parent=5 // pred_fallthru
        _
      %p239 = scmp.le.s32.totalorder 1, %s16
      %p240 = scmp.lt.s32.totalorder %s16, 3
      %p241 = pnand %p239, %p240
      %p242 = pneg %p241
      // Predicated region
      $region45: #{tpu_custom_call.1} parent=5 // pred_check
        _
      $region46: #{tpu_custom_call.1} parent=5 // pred_check_branch
        %244 = sbr.rel (%p241) target = $region48
      $region47: #{tpu_custom_call.1} parent=5 // pred_region
        %s245 = ssub.s32 %s16, 1
        %p246 = scmp.lt.s32.totalorder %s21, 1
        %s247 = scalar_select %p246, %s21, 1
        %s248 = smul.addr %s247, 12
        %s249 = smul.addr %s248, 4
        %s250 = scalar_lea.vmem %s0, %s249
        %p251 = pneg %p42
        %p252 = pneg %p39
        %p253 = pneg %p63
        %p254 = pneg %p60
        %p255 = pneg %p84
        %p256 = pneg %p81
        %p257 = pneg %p105
        %p258 = pneg %p102
        %p259 = pneg %p126
        %p260 = pneg %p123
        %p261 = pneg %p147
        %p262 = pneg %p144
        %p263 = pneg %p168
        %p264 = pneg %p165
        %p265 = pneg %p194
        %p266 = pneg %p191
        %s267 = sand.u32 %s181, 1
        %s268 = scalar_lea.sflag [#allocation3], %s267
        %s269 = sand.u32 %s181, 1
        %s270 = smul.addr %s269, 64
        %s271 = scalar_lea.vmem [#allocation2], %s270
        %p272 = scmp.lt.s32.totalorder %s21, 1
        %s273 = scalar_select %p272, %s21, 1
        %s274 = smul.addr %s273, 12
        %s275 = smul.addr %s274, 4
        %s276 = scalar_lea.vmem %s0, %s275
        %v278 = vld [vmem:[%s1] sm:$0xf]
        %v279 = vld [vmem:[%s1 + $0x4] sm:$0xf]
        %v280 = vld [vmem:[%s1 + $0x8] sm:$0xf]
        %v281 = vld [vmem:[%s1 + $0xc] sm:$0xf]
        %v282 = vld [vmem:[%s276] sm:$0xff]
        %v283 = vld [vmem:[%s276 + $0x8] sm:$0xff]
        %v284 = vld [vmem:[%s276 + $0x10] sm:$0xff]
        %v285 = vld [vmem:[%s276 + $0x18] sm:$0xff]
        %v286 = vld [vmem:[%s276 + $0x20] sm:$0xff]
        %v287 = vld [vmem:[%s276 + $0x28] sm:$0xff]
        %v288 = vld [vmem:[%s2] sm:$0xff]
        %v289 = vld [vmem:[%s2 + $0x8] sm:$0xff]
        %v290 = vld [vmem:[%s2 + $0x10] sm:$0xff]
        %v291 = vld [vmem:[%s2 + $0x18] sm:$0xff]
        %293 = vset.pattern.permute.xlu0 0
        %294 = vperm.xlu0 %293, %v288
        %v295 = vpop.permute.xlu0 %294
        %298 = vset.pattern.permute.xlu0 0
        %299 = vperm.xlu0 %298, %v289
        %v300 = vpop.permute.xlu0 %299
        %303 = vset.pattern.permute.xlu0 0
        %304 = vperm.xlu0 %303, %v290
        %v305 = vpop.permute.xlu0 %304
        %308 = vset.pattern.permute.xlu0 0
        %309 = vperm.xlu0 %308, %v291
        %v310 = vpop.permute.xlu0 %309
        %v316 = vunpack.c.l.b16 %v278
        %v317 = vunpack.c.l.b16 %v279
        %v318 = vunpack.c.l.b16 %v280
        %v319 = vunpack.c.l.b16 %v281
        %v320 = vpack.c.b16 %v317, %v316
        %v321 = vpack.c.b16 %v319, %v318
        %v328 = vunpack.c.l.b16 %v282
        %v329 = vunpack.c.h.b16 %v282
        %v330 = vunpack.c.l.b16 %v283
        %v331 = vunpack.c.h.b16 %v283
        %v332 = vunpack.c.l.b16 %v284
        %v333 = vunpack.c.h.b16 %v284
        %v334 = vunpack.c.l.b16 %v285
        %v335 = vunpack.c.h.b16 %v285
        %v336 = vunpack.c.l.b16 %v286
        %v337 = vunpack.c.h.b16 %v286
        %v338 = vunpack.c.l.b16 %v287
        %v339 = vunpack.c.h.b16 %v287
        %v340 = vpack.c.b16 %v330, %v328
        %v341 = vpack.c.b16 %v331, %v329
        %v342 = vpack.c.b16 %v334, %v332
        %v343 = vpack.c.b16 %v335, %v333
        %v344 = vpack.c.b16 %v338, %v336
        %v345 = vpack.c.b16 %v339, %v337
        %vm352 = vcmask 392192
        %v354 = vsel %vm352, %v320, 0
        %v357 = vsel %vm352, %v321, 0
        %359 = vmatprep.subr.bf16.mxu0 %v341
        %360 = vmatpush1.bf16.msra.mxu0 %v340
        %361 = vmatprep.subr.bf16.mxu0 %v343
        %362 = vmatpush1.bf16.msra.mxu0 %v342
        %363 = vmatprep.subr.bf16.mxu0 %v345
        %364 = vmatpush1.bf16.msra.mxu0 %v344
        %365 = vmatprep.subr.bf16.mxu0 0
        %366 = vmatpush1.bf16.msra.mxu0 0
        %367 = vmatprep.subr.bf16.mxu0 0
        %368 = vmatpush1.bf16.msra.mxu0 0
        %369 = vmatprep.subr.bf16.mxu0 0
        %370 = vmatpush1.bf16.msra.mxu0 0
        %371 = vmatprep.subr.bf16.mxu0 0
        %372 = vmatpush1.bf16.msra.mxu0 0
        %373 = vmatprep.subr.bf16.mxu0 0
        %374 = vmatpush1.bf16.msra.mxu0 0
        %375 = vmatprep.subr.bf16.mxu0 0
        %376 = vmatpush1.bf16.msra.mxu0 0
        %377 = vmatprep.subr.bf16.mxu0 0
        %378 = vmatpush1.bf16.msra.mxu0 0
        %379 = vmatprep.subr.bf16.mxu0 0
        %380 = vmatpush1.bf16.msra.mxu0 0
        %381 = vmatprep.subr.bf16.mxu0 0
        %382 = vmatpush1.bf16.msra.mxu0 0
        %383 = vmatprep.subr.bf16.mxu0 0
        %384 = vmatpush1.bf16.msra.mxu0 0
        %385 = vmatprep.subr.bf16.mxu0 0
        %386 = vmatpush1.bf16.msra.mxu0 0
        %387 = vmatprep.subr.bf16.mxu0 0
        %388 = vmatpush1.bf16.msra.mxu0 0
        %389 = vmatprep.subr.bf16.mxu0 0
        %390 = vmatpush1.bf16.msra.mxu0 0
        %391 = vmatprep.mubr.bf16.mxu0 0
        %392 = vmatmul.mubr.bf16.gmra.mrb[0].mxu0 %v354
        %v393 = vpop.f32.mrb[0].mxu0
        %v394 = vadd.f32 %v295, %v393
        %v395 = vpop.f32.mrb[0].mxu0
        %v396 = vadd.f32 %v295, %v395
        %v397 = vpop.f32.mrb[0].mxu0
        %v398 = vadd.f32 %v300, %v397
        %v399 = vpop.f32.mrb[0].mxu0
        %v400 = vadd.f32 %v300, %v399
        %401 = vmatprep.mubr.bf16.mxu0 0
        %402 = vmatmul.mubr.bf16.gmra.mrb[0].mxu0 %v357
        %v403 = vpop.f32.mrb[0].mxu0
        %v404 = vadd.f32 %v305, %v403
        %v405 = vpop.f32.mrb[0].mxu0
        %v406 = vadd.f32 %v305, %v405
        %v407 = vpop.f32.mrb[0].mxu0
        %v408 = vadd.f32 %v310, %v407
        %v409 = vpop.f32.mrb[0].mxu0
        %v410 = vadd.f32 %v310, %v409
        %411 = vdwg.mxu0
        %v412 = vlaneseq
        %v413 = vshrl.u32 %v412, 7
        %v414 = vadd.s32 %v413, 8
        %v415 = vadd.s32 %v413, 16
        %v416 = vadd.s32 %v413, 24
        %vm417 = vcmp.lt.s32.totalorder %v413, 16
        %vm418 = vcmp.lt.s32.totalorder %v414, 16
        %vm419 = vcmp.lt.s32.totalorder %v415, 16
        %vm420 = vcmp.lt.s32.totalorder %v416, 16
        %v421 = vsel %vm417, 1, 0
        %v422 = vsel %vm418, 1, 0
        %v423 = vsel %vm419, 1, 0
        %v424 = vsel %vm420, 1, 0
        %v425 = vcvt.s32.f32 %v421
        %v426 = vcvt.s32.f32 %v422
        %v427 = vcvt.s32.f32 %v423
        %v428 = vcvt.s32.f32 %v424
        %v429 = vsub.f32 1.0, %v425
        %v430 = vsub.f32 1.0, %v426
        %v431 = vsub.f32 1.0, %v427
        %v432 = vsub.f32 1.0, %v428
        %v433 = vadd.f32 %v394, %v396
        %434 = vadd.xlane.f32.xlu0 %v433
        %v435 = vpop.xlane.xlu0 %434
        %v436 = vadd.f32 %v398, %v400
        %437 = vadd.xlane.f32.xlu0 %v436
        %v438 = vpop.xlane.xlu0 %437
        %v439 = vadd.f32 %v404, %v406
        %440 = vadd.xlane.f32.xlu0 %v439
        %v441 = vpop.xlane.xlu0 %440
        %v442 = vadd.f32 %v408, %v410
        %443 = vadd.xlane.f32.xlu0 %v442
        %v444 = vpop.xlane.xlu0 %443
        %v445 = vmul.f32 %v435, %v425
        %v446 = vmul.f32 %v438, %v426
        %v447 = vmul.f32 %v441, %v427
        %v448 = vmul.f32 %v444, %v428
        %v449 = vadd.f32 %v445, %v446
        %v450 = vadd.f32 %v449, %v447
        %v451 = vadd.f32 %v450, %v448
        %v452 = vrot.slane %v451, 4
        %v453 = vadd.f32 %v451, %v452
        %v454 = vrot.slane %v453, 2
        %v455 = vadd.f32 %v453, %v454
        %v456 = vrot.slane %v455, 1
        %v457 = vadd.f32 %v455, %v456
        %v458 = vmul.f32 %v457, 0.00024414063
        %v459 = vmul.f32 %v435, %v429
        %v460 = vmul.f32 %v438, %v430
        %v461 = vmul.f32 %v441, %v431
        %v462 = vmul.f32 %v444, %v432
        %v463 = vadd.f32 %v459, %v460
        %v464 = vadd.f32 %v463, %v461
        %v465 = vadd.f32 %v464, %v462
        %v466 = vrot.slane %v465, 4
        %v467 = vadd.f32 %v465, %v466
        %v468 = vrot.slane %v467, 2
        %v469 = vadd.f32 %v467, %v468
        %v470 = vrot.slane %v469, 1
        %v471 = vadd.f32 %v469, %v470
        %v472 = vmul.f32 %v471, 0.00024414063
        %v473 = vmul.f32 %v425, %v458
        %v474 = vmul.f32 %v426, %v458
        %v475 = vmul.f32 %v427, %v458
        %v476 = vmul.f32 %v428, %v458
        %v477 = vmul.f32 %v429, %v472
        %v478 = vmul.f32 %v430, %v472
        %v479 = vmul.f32 %v431, %v472
        %v480 = vmul.f32 %v432, %v472
        %v481 = vadd.f32 %v473, %v477
        %v482 = vadd.f32 %v474, %v478
        %v483 = vadd.f32 %v475, %v479
        %v484 = vadd.f32 %v476, %v480
        %v485 = vsub.f32 %v394, %v481
        %v486 = vsub.f32 %v396, %v481
        %v487 = vsub.f32 %v398, %v482
        %v488 = vsub.f32 %v400, %v482
        %v489 = vsub.f32 %v404, %v483
        %v490 = vsub.f32 %v406, %v483
        %v491 = vsub.f32 %v408, %v484
        %v492 = vsub.f32 %v410, %v484
        %v493 = vmul.f32 %v485, %v485
        %v494 = vmul.f32 %v486, %v486
        %v495 = vmul.f32 %v487, %v487
        %v496 = vmul.f32 %v488, %v488
        %v497 = vmul.f32 %v489, %v489
        %v498 = vmul.f32 %v490, %v490
        %v499 = vmul.f32 %v491, %v491
        %v500 = vmul.f32 %v492, %v492
        %v501 = vadd.f32 %v493, %v494
        %502 = vadd.xlane.f32.xlu0 %v501
        %v503 = vpop.xlane.xlu0 %502
        %v504 = vadd.f32 %v495, %v496
        %505 = vadd.xlane.f32.xlu0 %v504
        %v506 = vpop.xlane.xlu0 %505
        %v507 = vadd.f32 %v497, %v498
        %508 = vadd.xlane.f32.xlu0 %v507
        %v509 = vpop.xlane.xlu0 %508
        %v510 = vadd.f32 %v499, %v500
        %511 = vadd.xlane.f32.xlu0 %v510
        %v512 = vpop.xlane.xlu0 %511
        %v513 = vmul.f32 %v503, %v425
        %v514 = vmul.f32 %v506, %v426
        %v515 = vmul.f32 %v509, %v427
        %v516 = vmul.f32 %v512, %v428
        %v517 = vadd.f32 %v513, %v514
        %v518 = vadd.f32 %v517, %v515
        %v519 = vadd.f32 %v518, %v516
        %v520 = vrot.slane %v519, 4
        %v521 = vadd.f32 %v519, %v520
        %v522 = vrot.slane %v521, 2
        %v523 = vadd.f32 %v521, %v522
        %v524 = vrot.slane %v523, 1
        %v525 = vadd.f32 %v523, %v524
        %v526 = vmul.f32 %v525, 0.00024414063
        %v527 = vmul.f32 %v503, %v429
        %v528 = vmul.f32 %v506, %v430
        %v529 = vmul.f32 %v509, %v431
        %v530 = vmul.f32 %v512, %v432
        %v531 = vadd.f32 %v527, %v528
        %v532 = vadd.f32 %v531, %v529
        %v533 = vadd.f32 %v532, %v530
        %v534 = vrot.slane %v533, 4
        %v535 = vadd.f32 %v533, %v534
        %v536 = vrot.slane %v535, 2
        %v537 = vadd.f32 %v535, %v536
        %v538 = vrot.slane %v537, 1
        %v539 = vadd.f32 %v537, %v538
        %v540 = vmul.f32 %v539, 0.00024414063
        %v541 = vadd.f32 %v526, 1e-05
        %v542 = vrsqrt.pop %v541
        %v543 = vmul.f32 %v425, %v542
        %v544 = vmul.f32 %v426, %v542
        %v545 = vmul.f32 %v427, %v542
        %v546 = vmul.f32 %v428, %v542
        %v547 = vadd.f32 %v540, 1e-05
        %v548 = vrsqrt.pop %v547
        %v549 = vmul.f32 %v429, %v548
        %v550 = vmul.f32 %v430, %v548
        %v551 = vmul.f32 %v431, %v548
        %v552 = vmul.f32 %v432, %v548
        %v553 = vadd.f32 %v543, %v549
        %v554 = vadd.f32 %v544, %v550
        %v555 = vadd.f32 %v545, %v551
        %v556 = vadd.f32 %v546, %v552
        %v557 = vmul.f32 %v485, %v553
        %v558 = vmul.f32 %v486, %v553
        %v559 = vmul.f32 %v487, %v554
        %v560 = vmul.f32 %v488, %v554
        %v561 = vmul.f32 %v489, %v555
        %v562 = vmul.f32 %v490, %v555
        %v563 = vmul.f32 %v491, %v556
        %v564 = vmul.f32 %v492, %v556
        %v565 = vld [vmem:[%s3] sm:$0xff]
        %v566 = vld [vmem:[%s3 + $0x8] sm:$0xff]
        %v567 = vld [vmem:[%s3 + $0x10] sm:$0xff]
        %v568 = vld [vmem:[%s3 + $0x18] sm:$0xff]
        %570 = vset.pattern.permute.xlu0 0
        %571 = vperm.xlu0 %570, %v565
        %v572 = vpop.permute.xlu0 %571
        %575 = vset.pattern.permute.xlu0 0
        %576 = vperm.xlu0 %575, %v566
        %v577 = vpop.permute.xlu0 %576
        %580 = vset.pattern.permute.xlu0 0
        %581 = vperm.xlu0 %580, %v567
        %v582 = vpop.permute.xlu0 %581
        %585 = vset.pattern.permute.xlu0 0
        %586 = vperm.xlu0 %585, %v568
        %v587 = vpop.permute.xlu0 %586
        %v589 = vmul.f32 %v557, %v572
        %v590 = vmul.f32 %v558, %v572
        %v591 = vmul.f32 %v559, %v577
        %v592 = vmul.f32 %v560, %v577
        %v593 = vmul.f32 %v561, %v582
        %v594 = vmul.f32 %v562, %v582
        %v595 = vmul.f32 %v563, %v587
        %v596 = vmul.f32 %v564, %v587
        %v597 = vld [vmem:[%s4] sm:$0xff]
        %v598 = vld [vmem:[%s4 + $0x8] sm:$0xff]
        %v599 = vld [vmem:[%s4 + $0x10] sm:$0xff]
        %v600 = vld [vmem:[%s4 + $0x18] sm:$0xff]
        %602 = vset.pattern.permute.xlu0 0
        %603 = vperm.xlu0 %602, %v597
        %v604 = vpop.permute.xlu0 %603
        %607 = vset.pattern.permute.xlu0 0
        %608 = vperm.xlu0 %607, %v598
        %v609 = vpop.permute.xlu0 %608
        %612 = vset.pattern.permute.xlu0 0
        %613 = vperm.xlu0 %612, %v599
        %v614 = vpop.permute.xlu0 %613
        %617 = vset.pattern.permute.xlu0 0
        %618 = vperm.xlu0 %617, %v600
        %v619 = vpop.permute.xlu0 %618
        %v621 = vadd.f32 %v589, %v604
        %v622 = vadd.f32 %v590, %v604
        %v623 = vadd.f32 %v591, %v609
        %v624 = vadd.f32 %v592, %v609
        %v625 = vadd.f32 %v593, %v614
        %v626 = vadd.f32 %v594, %v614
        %v627 = vadd.f32 %v595, %v619
        %v628 = vadd.f32 %v596, %v619
        %vm629 = vcmp.gt.f32.partialorder %v621, 0.0
        %vm630 = vcmp.gt.f32.partialorder %v622, 0.0
        %vm631 = vcmp.gt.f32.partialorder %v623, 0.0
        %vm632 = vcmp.gt.f32.partialorder %v624, 0.0
        %vm633 = vcmp.gt.f32.partialorder %v625, 0.0
        %vm634 = vcmp.gt.f32.partialorder %v626, 0.0
        %vm635 = vcmp.gt.f32.partialorder %v627, 0.0
        %vm636 = vcmp.gt.f32.partialorder %v628, 0.0
        %v637 = vmul.f32 %v621, 0.2
        %v638 = vmul.f32 %v622, 0.2
        %v639 = vmul.f32 %v623, 0.2
        %v640 = vmul.f32 %v624, 0.2
        %v641 = vmul.f32 %v625, 0.2
        %v642 = vmul.f32 %v626, 0.2
        %v643 = vmul.f32 %v627, 0.2
        %v644 = vmul.f32 %v628, 0.2
        %v645 = vsel %vm629, %v621, %v637
        %v646 = vsel %vm630, %v622, %v638
        %v647 = vsel %vm631, %v623, %v639
        %v648 = vsel %vm632, %v624, %v640
        %v649 = vsel %vm633, %v625, %v641
        %v650 = vsel %vm634, %v626, %v642
        %v651 = vsel %vm635, %v627, %v643
        %v652 = vsel %vm636, %v628, %v644
        %v653 = vadd.f32 %v645, %v646
        %654 = vadd.xlane.f32.xlu0 %v653
        %v655 = vpop.xlane.xlu0 %654
        %v656 = vadd.f32 %v647, %v648
        %657 = vadd.xlane.f32.xlu0 %v656
        %v658 = vpop.xlane.xlu0 %657
        %v659 = vadd.f32 %v649, %v650
        %660 = vadd.xlane.f32.xlu0 %v659
        %v661 = vpop.xlane.xlu0 %660
        %v662 = vadd.f32 %v651, %v652
        %663 = vadd.xlane.f32.xlu0 %v662
        %v664 = vpop.xlane.xlu0 %663
        %v665 = vmul.f32 %v655, 0.00390625
        %v666 = vmul.f32 %v658, 0.00390625
        %v667 = vmul.f32 %v661, 0.00390625
        %v668 = vmul.f32 %v664, 0.00390625
        %v669 = vld [vmem:[%s5] sm:$0xff]
        %v670 = vld [vmem:[%s5 + $0x8] sm:$0xff]
        %v671 = vld [vmem:[%s5 + $0x10] sm:$0xff]
        %v672 = vld [vmem:[%s5 + $0x18] sm:$0xff]
        %v673 = vmul.f32 %v665, %v669
        %v674 = vmul.f32 %v666, %v670
        %v675 = vmul.f32 %v667, %v671
        %v676 = vmul.f32 %v668, %v672
        %vm677 = vcmask 15360
        %v678 = vsel %vm677, %v673, 0.0
        %v679 = vsel %vm677, %v674, 0.0
        %v680 = vadd.f32 %v678, %v679
        %v681 = vsel %vm677, %v675, 0.0
        %v682 = vadd.f32 %v680, %v681
        %v683 = vsel %vm677, %v676, 0.0
        %v684 = vadd.f32 %v682, %v683
        %v685 = vrot.slane %v684, 4
        %v686 = vadd.f32 %v684, %v685
        %v687 = vrot.slane %v686, 2
        %v688 = vadd.f32 %v686, %v687
        %v689 = vrot.slane %v688, 1
        %v690 = vadd.f32 %v688, %v689
        %v691 = vmax.f32 %v690, 0.0
        %v692 = vld [vmem:[%s6] sm:$0xff]
        %v693 = vld [vmem:[%s6 + $0x8] sm:$0xff]
        %v694 = vld [vmem:[%s6 + $0x10] sm:$0xff]
        %v695 = vld [vmem:[%s6 + $0x18] sm:$0xff]
        %v696 = vmul.f32 %v692, %v691
        %v697 = vmul.f32 %v693, %v691
        %v698 = vmul.f32 %v694, %v691
        %v699 = vmul.f32 %v695, %v691
        %v700 = vsel %vm677, %v696, 0.0
        %701 = vadd.xlane.f32.xlu0 %v700
        %v702 = vpop.xlane.xlu0 %701
        %v703 = vsel %vm677, %v697, 0.0
        %704 = vadd.xlane.f32.xlu0 %v703
        %v705 = vpop.xlane.xlu0 %704
        %v706 = vsel %vm677, %v698, 0.0
        %707 = vadd.xlane.f32.xlu0 %v706
        %v708 = vpop.xlane.xlu0 %707
        %v709 = vsel %vm677, %v699, 0.0
        %710 = vadd.xlane.f32.xlu0 %v709
        %v711 = vpop.xlane.xlu0 %710
        %v712 = vxor.u32 %v702, 2147483648
        %v713 = vxor.u32 %v705, 2147483648
        %v714 = vxor.u32 %v708, 2147483648
        %v715 = vxor.u32 %v711, 2147483648
        %v716 = vmul.f32 %v712, 1.442695
        %v717 = vpow.pop %v716
        %v718 = vmul.f32 %v713, 1.442695
        %v719 = vpow.pop %v718
        %v720 = vmul.f32 %v714, 1.442695
        %v721 = vpow.pop %v720
        %v722 = vmul.f32 %v715, 1.442695
        %v723 = vpow.pop %v722
        %v724 = vadd.f32 %v717, 1.0
        %v725 = vadd.f32 %v719, 1.0
        %v726 = vadd.f32 %v721, 1.0
        %v727 = vadd.f32 %v723, 1.0
        %v728 = vrcp.pop %v724
        %v729 = vmul.f32 1.0, %v728
        %v730 = vrcp.pop %v725
        %v731 = vmul.f32 1.0, %v730
        %v732 = vrcp.pop %v726
        %v733 = vmul.f32 1.0, %v732
        %v734 = vrcp.pop %v727
        %v735 = vmul.f32 1.0, %v734
        %v736 = vmul.f32 %v645, %v729
        %v737 = vmul.f32 %v646, %v729
        %v738 = vmul.f32 %v647, %v731
        %v739 = vmul.f32 %v648, %v731
        %v740 = vmul.f32 %v649, %v733
        %v741 = vmul.f32 %v650, %v733
        %v742 = vmul.f32 %v651, %v735
        %v743 = vmul.f32 %v652, %v735
        %744 = vst [vmem:[%s271] sm:$0xff] %v736
        %745 = vst [vmem:[%s271 + $0x8] sm:$0xff] %v737
        %746 = vst [vmem:[%s271 + $0x10] sm:$0xff] %v738
        %747 = vst [vmem:[%s271 + $0x18] sm:$0xff] %v739
        %748 = vst [vmem:[%s271 + $0x20] sm:$0xff] %v740
        %749 = vst [vmem:[%s271 + $0x28] sm:$0xff] %v741
        %750 = vst [vmem:[%s271 + $0x30] sm:$0xff] %v742
        %751 = vst [vmem:[%s271 + $0x38] sm:$0xff] %v743
        %s752 = sand.u32 %s181, 1
        %s753 = scalar_lea.sflag [#allocation3], %s752
        %s754 = sand.u32 %s181, 1
        %s755 = smul.addr %s754, 64
        %s756 = scalar_lea.vmem [#allocation2], %s755
        // Predicated region
        $region49: #{tpu_custom_call.1} parent=47 // pred_check
          %p757 = pneg %p191
        $region50: #{tpu_custom_call.1} parent=47 // pred_check_branch
          %759 = sbr.rel (%p757) target = $region52
        $region51: #{tpu_custom_call.1} parent=47 // pred_region
          %s761 = ssub.s32 1024, 1024
          %762 = vsyncadd %s753, %s761
          %s763 = smul.addr %s21, 8
          %s764 = smul.addr %s763, 128
          %s765 = scalar_lea.hbm %s7, %s764
          %s766 = sshll.u32 %s756, 4
          %s767 = int_to_ptr.vmem [resolvable:$true] %s766
          %772 = dma.vmem_to_hbm [thread:$0]  %s767, 1024, %s765, %s753, 256, 256, 16
        $region52: #{tpu_custom_call.1} parent=47 // pred_fallthru
          _
      $region48: #{tpu_custom_call.1} parent=5 // pred_fallthru
        _
      %p773 = scmp.le.s32.totalorder 2, %s16
      // Predicated region
      $region53: #{tpu_custom_call.1} parent=5 // pred_check
        %p774 = pneg %p773
      $region54: #{tpu_custom_call.1} parent=5 // pred_check_branch
        %776 = sbr.rel (%p774) target = $region56
      $region55: #{tpu_custom_call.1} parent=5 // pred_region
        %s777 = ssub.s32 %s16, 2
        // Predicated region
        $region57: #{tpu_custom_call.1} parent=55 // pred_check
          %p778 = pneg %p197
        $region58: #{tpu_custom_call.1} parent=55 // pred_check_branch
          %780 = sbr.rel (%p778) target = $region60
        $region59: #{tpu_custom_call.1} parent=55 // pred_region
          %s781 = sand.u32 %s182, 1
          %s782 = scalar_lea.sflag [#allocation3], %s781
          %s783 = sand.u32 %s182, 1
          %s784 = smul.addr %s783, 64
          %s785 = scalar_lea.vmem [#allocation2], %s784
          %786 = dma.done %s782, 1024
        $region60: #{tpu_custom_call.1} parent=55 // pred_fallthru
          _
      $region56: #{tpu_custom_call.1} parent=5 // pred_fallthru
        _
    $region6: #{tpu_custom_call.1} parent=1 // loop_footer
      %s20 = sadd.s32 1, %s16
    $region7: #{tpu_custom_call.1} parent=1 // loop_footer_branch
      %15 = sbr.rel target = $region3
    $region8: #{tpu_custom_call.1} parent=1 // loop_exit
      _
    %787 = vsyncpa [#allocation3], 1
    %s788 = scalar_lea.sflag [#allocation3], 1
    %789 = vsyncpa %s788, 1

</llo_original>
